<compile_context>
chip_gen: v7x
topology: tpu7x:2x2x1
jax: 0.10.0
libtpu: 0.0.40
codegen_flags: <defaults>
</compile_context>

<pallas_src>
import jax
import jax.numpy as jnp
from jax.experimental import pallas as pl
from jax.experimental.pallas import tpu as pltpu

LANE = 128


# ----------------------------------------------------------------------------
# Small helpers
# ----------------------------------------------------------------------------
def _round_up(x, m):
    return (x + m - 1) // m * m


def _pad2d(x, rows, cols):
    r, c = x.shape
    if r == rows and c == cols:
        return x
    return jnp.pad(x, ((0, rows - r), (0, cols - c)))


# ----------------------------------------------------------------------------
# Generation-aware sizing (v5e/v6e: 128 MiB VMEM, v7x: 64 MiB)
# ----------------------------------------------------------------------------
def _detect_vmem_capacity():
    try:
        info = pltpu.get_tpu_info()
        cap = getattr(info, "vmem_capacity_bytes", None)
        if cap:
            return int(cap)
    except Exception:
        pass
    return None


_VMEM_PHYS = _detect_vmem_capacity()
if _VMEM_PHYS is not None and _VMEM_PHYS >= (96 << 20):
    # v5e / v6e class: large row tiles (~85%+ of HBM roofline), high scoped cap.
    _DEF_TILE_M = 1024
    _VMEM_LIMIT_CAP = 112 << 20
    _SINGLE_BUFFER_WEIGHTS = False
elif _VMEM_PHYS is not None:
    # v7x class: 64 MiB physical -> leave Mosaic scratch headroom, and
    # single-buffer the grid-invariant weights so the budget funds tile_m.
    _DEF_TILE_M = 512
    _VMEM_LIMIT_CAP = 52 << 20
    _SINGLE_BUFFER_WEIGHTS = True
else:
    # Unknown part: conservative settings (match the previously-validated run).
    _DEF_TILE_M = 512
    _VMEM_LIMIT_CAP = 48 << 20
    _SINGLE_BUFFER_WEIGHTS = False


def _clamp_tile(m, tile_m):
    # multiple of 16 (sublane-aligned), never bigger than the (rounded) row count
    return max(16, min(tile_m, _round_up(m, 16)))


def _vmem_limit_bytes(tile_m, stream_row_bytes, weight_bytes, scratch_bytes):
    w_mult = 1 if _SINGLE_BUFFER_WEIGHTS else 2
    need = 2 * tile_m * stream_row_bytes + w_mult * weight_bytes + scratch_bytes
    return int(min(max(2 * need, 16 << 20), _VMEM_LIMIT_CAP))


def _resident_spec(shape):
    """Grid-invariant (weight/bias) operand: resident in VMEM for the whole call."""
    idx = (lambda i: (0, 0))
    if _SINGLE_BUFFER_WEIGHTS:
        try:
            # v7x: don't waste VMEM double-buffering something fetched once.
            return pl.BlockSpec(shape, idx, pipeline_mode=pl.Buffered(1))
        except Exception:
            pass
    return pl.BlockSpec(shape, idx)


# ----------------------------------------------------------------------------
# Kernel 1: plain 2-layer MLP (base policy), tiled over rows
# ----------------------------------------------------------------------------
def _mlp_kernel(x_ref, w1_ref, b1_ref, w2_ref, b2_ref, o_ref):
    # bf16 MXU inputs, f32 accumulation; bias/ReLU in f32.
    h = jnp.dot(x_ref[...].astype(jnp.bfloat16), w1_ref[...],
                preferred_element_type=jnp.float32) + b1_ref[...]
    h = jnp.maximum(h, 0.0)
    o = jnp.dot(h.astype(jnp.bfloat16), w2_ref[...],
                preferred_element_type=jnp.float32) + b2_ref[...]
    o_ref[...] = o.astype(o_ref.dtype)


def mlp_forward(x2d, p, tile_m=None, out_dtype=jnp.bfloat16):
    """Linear -> ReLU -> Linear.  x2d is already lane-padded to p['w1'].shape[0].
    Returns [m_pad, N_pad] in `out_dtype` (bf16 by default: halves the HBM write)."""
    if tile_m is None:
        tile_m = _DEF_TILE_M
    m = x2d.shape[0]
    kp, hp = p['w1'].shape
    np_ = p['w2'].shape[1]
    assert x2d.shape[1] == kp
    tile_m = _clamp_tile(m, tile_m)
    n_tiles = pl.cdiv(m, tile_m)
    m_pad = n_tiles * tile_m
    x = _pad2d(x2d, m_pad, kp)          # row pad only; base policy rows are tiny (B)

    flops = 2 * m_pad * (kp * hp + hp * np_)
    bytes_accessed = int(m_pad * kp * x.dtype.itemsize
                         + m_pad * np_ * jnp.dtype(out_dtype).itemsize
                         + kp * hp * 2 + hp * np_ * 2 + (hp + np_) * 4)
    vmem = _vmem_limit_bytes(
        tile_m,
        stream_row_bytes=kp * x.dtype.itemsize + np_ * jnp.dtype(out_dtype).itemsize,
        weight_bytes=kp * hp * 2 + hp * np_ * 2 + (hp + np_) * 4,
        scratch_bytes=tile_m * (hp + np_) * 4)

    return pl.pallas_call(
        _mlp_kernel,
        out_shape=jax.ShapeDtypeStruct((m_pad, np_), out_dtype),
        grid=(n_tiles,),
        in_specs=[
            pl.BlockSpec((tile_m, kp), lambda i: (i, 0)),   # activations: tiled
            _resident_spec((kp, hp)),                       # weights: resident
            _resident_spec((1, hp)),
            _resident_spec((hp, np_)),
            _resident_spec((1, np_)),
        ],
        out_specs=pl.BlockSpec((tile_m, np_), lambda i: (i, 0)),
        compiler_params=pltpu.CompilerParams(
            dimension_semantics=("parallel",),
            vmem_limit_bytes=vmem),
        cost_estimate=pl.CostEstimate(flops=flops, transcendentals=0,
                                      bytes_accessed=bytes_accessed),
    )(x, p['w1'], p['b1'], p['w2'], p['b2'])


# ----------------------------------------------------------------------------
# Kernel 2: fused residual-BC MLP forward + weighted MSE (single pallas_call)
#           -> per-tile partial sums, grid axis "parallel" (megacore on v7x)
# ----------------------------------------------------------------------------
def fused_residual_bc_loss(x2d, p, target2d, w_col, tile_m=None):
    """loss = (1/M) * sum_i w_i * (1/A) * sum_d (mlp(x)_id - target_id)^2."""
    if tile_m is None:
        tile_m = _DEF_TILE_M
    m, a = target2d.shape
    kp, hp = p['w1'].shape
    np_ = p['w2'].shape[1]
    assert x2d.shape == (m, kp)
    tile_m = _clamp_tile(m, tile_m)
    n_tiles = pl.cdiv(m, tile_m)
    has_w = w_col is not None
    need_mask = (m % tile_m) != 0        # partial last tile -> garbage rows to mask
    inv = 1.0 / float(m * a)

    def kernel(*refs):
        if has_w:
            (x_ref, w1_ref, b1_ref, w2_ref, b2_ref, tgt_ref, wc_ref, out_ref) = refs
        else:
            (x_ref, w1_ref, b1_ref, w2_ref, b2_ref, tgt_ref, out_ref) = refs

        h = jnp.dot(x_ref[...].astype(jnp.bfloat16), w1_ref[...],
                    preferred_element_type=jnp.float32) + b1_ref[...]
        h = jnp.maximum(h, 0.0)
        pred = jnp.dot(h.astype(jnp.bfloat16), w2_ref[...],
                       preferred_element_type=jnp.float32) + b2_ref[...]
        # target streamed at natural width [tile_m, A]; compare only real lanes
        d = pred[:, :a] - tgt_ref[...]
        per_row = jnp.sum(d * d, axis=-1, keepdims=True)          # [tile_m, 1]
        if has_w:
            per_row = per_row * wc_ref[...]
        if need_mask:
            row = (pl.program_id(0) * tile_m
                   + jax.lax.broadcasted_iota(jnp.int32, (tile_m, 1), 0))
            per_row = jnp.where(row < m, per_row, 0.0)
        tile_sum = jnp.sum(per_row, axis=0, keepdims=True)          # (1, 1)
        out_ref[...] = (tile_sum * inv).reshape(1, 1, 1)            # per-tile partial

    in_specs = [
        pl.BlockSpec((tile_m, kp), lambda i: (i, 0)),   # x: bf16, lane-dense
        _resident_spec((kp, hp)),
        _resident_spec((1, hp)),
        _resident_spec((hp, np_)),
        _resident_spec((1, np_)),
        pl.BlockSpec((tile_m, a), lambda i: (i, 0)),    # target at natural width
    ]
    args = [x2d, p['w1'], p['b1'], p['w2'], p['b2'], target2d]
    w_row_bytes = 0
    if has_w:
        in_specs.append(pl.BlockSpec((tile_m, 1), lambda i: (i, 0)))
        args.append(w_col)
        w_row_bytes = 4

    flops = 2 * (n_tiles * tile_m) * (kp * hp + hp * np_)
    bytes_accessed = int(m * kp * x2d.dtype.itemsize + m * a * 4
                         + kp * hp * 2 + hp * np_ * 2 + (hp + np_) * 4
                         + (m * 4 if has_w else 0) + n_tiles * 4)
    vmem = _vmem_limit_bytes(
        tile_m,
        stream_row_bytes=kp * x2d.dtype.itemsize + a * 4 + w_row_bytes,
        weight_bytes=kp * hp * 2 + hp * np_ * 2 + (hp + np_) * 4,
        scratch_bytes=tile_m * (hp + np_) * 4)

    partial = pl.pallas_call(
        kernel,
        out_shape=jax.ShapeDtypeStruct((n_tiles, 1, 1), jnp.float32),
        grid=(n_tiles,),
        in_specs=in_specs,
        out_specs=pl.BlockSpec((1, 1, 1), lambda i: (i, 0, 0)),
        compiler_params=pltpu.CompilerParams(
            dimension_semantics=("parallel",),   # independent per-tile partials
            vmem_limit_bytes=vmem),
        cost_estimate=pl.CostEstimate(flops=flops, transcendentals=0,
                                      bytes_accessed=bytes_accessed),
    )(*args)
    return jnp.sum(partial)


# ----------------------------------------------------------------------------
# Parameter init: natural-size random init, then one-time lane pad to 128
# multiples and cast matmul weights to bf16 (checkpoint-load-time transform)
# ----------------------------------------------------------------------------
def init_mlp(key, din, hidden, dout, scale=0.1):
    k1, k2, k3, k4 = jax.random.split(key, 4)
    w1 = scale * jax.random.normal(k1, (din, hidden), jnp.float32)
    b1 = scale * jax.random.normal(k2, (1, hidden), jnp.float32)
    w2 = scale * jax.random.normal(k3, (hidden, dout), jnp.float32)
    b2 = scale * jax.random.normal(k4, (1, dout), jnp.float32)
    kp, hp, np_ = _round_up(din, LANE), _round_up(hidden, LANE), _round_up(dout, LANE)
    return {
        'w1': _pad2d(w1, kp, hp).astype(jnp.bfloat16),
        'b1': _pad2d(b1, 1, hp),
        'w2': _pad2d(w2, hp, np_).astype(jnp.bfloat16),
        'b2': _pad2d(b2, 1, np_),
        'din': din, 'hidden': hidden, 'dout': dout,
    }


def _fused_concat(parts_bf16, kp):
    """One-pass concat that also appends the zero lane block up to kp (no
    separate pad / cast HBM passes)."""
    m = parts_bf16[0].shape[0]
    k = sum(p.shape[-1] for p in parts_bf16)
    if kp > k:
        parts_bf16 = list(parts_bf16) + [jnp.zeros((m, kp - k), jnp.bfloat16)]
    return jnp.concatenate(parts_bf16, axis=-1)


# ----------------------------------------------------------------------------
# ResBC forward
# ----------------------------------------------------------------------------
def res_bc_forward(params, obs_dict, actions, weights=None, predict_residual=False):
    A = actions.shape[-1]
    B = actions.shape[0]
    actions2d = actions.reshape(-1, A).astype(jnp.float32)              # [B*T, A]

    base_p = params['base']
    res_p = params['residual']

    # --- base policy on first-timestep obs (detached), emits a T*A chunk ---
    obs_keys = sorted(obs_dict.keys())
    obs0 = _fused_concat(
        [obs_dict[k][:, 0, :].astype(jnp.bfloat16) for k in obs_keys],
        base_p['w1'].shape[0])
    base_out = mlp_forward(obs0, base_p)                                # bf16 [B_pad, N_pad]
    base_chunk = base_out[:B, :base_p['dout']]                          # [B, T*A]
    base_actions = jax.lax.stop_gradient(base_chunk).reshape(-1, A)     # [B*T, A] bf16

    # --- flatten obs, append base action as the '_action' low-dim key; one
    #     fused bf16 concat produces the lane-dense residual-policy input ---
    flat = {k: v.reshape(-1, v.shape[-1]).astype(jnp.bfloat16)
            for k, v in obs_dict.items()}
    flat['_action'] = base_actions
    x = _fused_concat([flat[k] for k in sorted(flat.keys())], res_p['w1'].shape[0])

    if predict_residual:
        actions2d = actions2d - base_actions.astype(jnp.float32)

    w_col = None if weights is None else weights.reshape(-1, 1).astype(jnp.float32)

    # --- fused residual-BC MLP forward + weighted-MSE loss (one kernel) ---
    return fused_residual_bc_loss(x, res_p, actions2d, w_col)


# ----------------------------------------------------------------------------
# Pure-JAX reference (f32) for correctness checking
# ----------------------------------------------------------------------------
def _ref_mlp(x, p):
    w1 = p['w1'][:p['din'], :p['hidden']].astype(jnp.float32)
    w2 = p['w2'][:p['hidden'], :p['dout']].astype(jnp.float32)
    h = jnp.maximum(x @ w1 + p['b1'][:, :p['hidden']], 0.0)
    return h @ w2 + p['b2'][:, :p['dout']]


def _ref_forward(params, obs_dict, actions, weights=None, predict_residual=False):
    A = actions.shape[-1]
    actions2d = actions.reshape(-1, A)
    obs0 = jnp.concatenate([obs_dict[k][:, 0, :] for k in sorted(obs_dict)], axis=-1)
    base = jax.lax.stop_gradient(_ref_mlp(obs0, params['base'])).reshape(-1, A)
    obs_flat = {k: v.reshape(-1, v.shape[-1]) for k, v in obs_dict.items()}
    obs_flat['_action'] = base
    x = jnp.concatenate([obs_flat[k] for k in sorted(obs_flat.keys())], axis=-1)
    if predict_residual:
        actions2d = actions2d - base
    pred = _ref_mlp(x, params['residual'])
    per = jnp.mean((pred - actions2d) ** 2, axis=-1)
    w = jnp.ones_like(per) if weights is None else weights.reshape(-1)
    return jnp.mean(w * per)


# ----------------------------------------------------------------------------
# Main
# ----------------------------------------------------------------------------
if __name__ == "__main__":
    key = jax.random.PRNGKey(0)
    B, T, A = 2, 8, 4
    D_POS, D_OBJ, HIDDEN = 16, 8, 32

    keys = jax.random.split(key, 6)
    obs_dict = {
        'agent_pos': jax.random.normal(keys[0], (B, T, D_POS), jnp.float32),
        'object':    jax.random.normal(keys[1], (B, T, D_OBJ), jnp.float32),
    }
    actions = jax.random.normal(keys[2], (B, T, A), jnp.float32)
    weights = jax.random.uniform(keys[3], (B, T), dtype=jnp.float32)

    params = {
        # base policy: obs[:,0,:] (D_POS+D_OBJ) -> T*A action chunk
        'base': init_mlp(keys[4], D_POS + D_OBJ, HIDDEN, T * A),
        # residual policy: obs (+ '_action') -> A
        'residual': init_mlp(keys[5], A + D_POS + D_OBJ, HIDDEN, A),
    }

    # Weighted path
    loss_w = res_bc_forward(params, obs_dict, actions, weights=weights,
                            predict_residual=False)
    jax.block_until_ready(loss_w)
    ref_w = _ref_forward(params, obs_dict, actions, weights=weights,
                         predict_residual=False)
    assert loss_w.shape == () and jnp.isfinite(loss_w)
    assert jnp.allclose(loss_w, ref_w, rtol=0.1, atol=1e-3), (loss_w, ref_w)

    # Unweighted path (skips the weight-column input entirely)
    loss_u = res_bc_forward(params, obs_dict, actions, weights=None,
                            predict_residual=False)
    jax.block_until_ready(loss_u)
    ref_u = _ref_forward(params, obs_dict, actions, weights=None,
                         predict_residual=False)
    assert loss_u.shape == () and jnp.isfinite(loss_u)
    assert jnp.allclose(loss_u, ref_u, rtol=0.1, atol=1e-3), (loss_u, ref_u)

    print("KERNEL_OK")
</pallas_src>

<mosaic_0001>
module attributes {stable_mosaic.version = 11 : i64} {
  func.func @_mlp_kernel(%arg0: i32, %arg1: memref<16x128xbf16, #tpu.memory_space<vmem>>, %arg2: memref<128x128xbf16, #tpu.memory_space<vmem>>, %arg3: memref<1x128xf32, #tpu.memory_space<vmem>>, %arg4: memref<128x128xbf16, #tpu.memory_space<vmem>>, %arg5: memref<1x128xf32, #tpu.memory_space<vmem>>, %arg6: memref<16x128xbf16, #tpu.memory_space<vmem>>) attributes {dimension_semantics = [#tpu.dimension_semantics<parallel>], iteration_bounds = array<i64: 1>, scalar_prefetch = 0 : i64, scratch_operands = 0 : i64, tpu.core_type = #tpu.core_type<tc>, window_params = [{transform_indices = @transform_0, window_bounds = array<i64: 16, 128>}, {pipeline_mode = #tpu.pipeline_mode<synchronous>, transform_indices = @transform_1, window_bounds = array<i64: 128, 128>}, {pipeline_mode = #tpu.pipeline_mode<synchronous>, transform_indices = @transform_2, window_bounds = array<i64: 1, 128>}, {pipeline_mode = #tpu.pipeline_mode<synchronous>, transform_indices = @transform_3, window_bounds = array<i64: 128, 128>}, {pipeline_mode = #tpu.pipeline_mode<synchronous>, transform_indices = @transform_4, window_bounds = array<i64: 1, 128>}, {transform_indices = @transform_5, window_bounds = array<i64: 16, 128>}]} {
    %c0 = arith.constant 0 : index
    %c0_0 = arith.constant 0 : index
    %0 = vector.load %arg1[%c0, %c0_0] : memref<16x128xbf16, #tpu.memory_space<vmem>>, vector<16x128xbf16>
    %c0_1 = arith.constant 0 : index
    %c0_2 = arith.constant 0 : index
    %1 = vector.load %arg2[%c0_1, %c0_2] : memref<128x128xbf16, #tpu.memory_space<vmem>>, vector<128x128xbf16>
    %cst = arith.constant dense<0.000000e+00> : vector<16x128xf32>
    %2 = tpu.matmul %0, %1, %cst {dimension_numbers = #tpu.dot_dimension_numbers<[1], [0], [0], [1], [0, 0, 1, 1], [], []>} : vector<16x128xbf16>, vector<128x128xbf16>, vector<16x128xf32> -> vector<16x128xf32>
    %c0_3 = arith.constant 0 : index
    %c0_4 = arith.constant 0 : index
    %3 = vector.load %arg3[%c0_3, %c0_4] : memref<1x128xf32, #tpu.memory_space<vmem>>, vector<1x128xf32>
    %4 = vector.broadcast %3 : vector<1x128xf32> to vector<16x128xf32>
    %5 = arith.addf %2, %4 : vector<16x128xf32>
    %cst_5 = arith.constant 0.000000e+00 : f32
    %6 = vector.broadcast %cst_5 : f32 to vector<16x128xf32>
    %7 = arith.maximumf %5, %6 : vector<16x128xf32>
    %8 = arith.truncf %7 : vector<16x128xf32> to vector<16x128xbf16>
    %c0_6 = arith.constant 0 : index
    %c0_7 = arith.constant 0 : index
    %9 = vector.load %arg4[%c0_6, %c0_7] : memref<128x128xbf16, #tpu.memory_space<vmem>>, vector<128x128xbf16>
    %cst_8 = arith.constant dense<0.000000e+00> : vector<16x128xf32>
    %10 = tpu.matmul %8, %9, %cst_8 {dimension_numbers = #tpu.dot_dimension_numbers<[1], [0], [0], [1], [0, 0, 1, 1], [], []>} : vector<16x128xbf16>, vector<128x128xbf16>, vector<16x128xf32> -> vector<16x128xf32>
    %c0_9 = arith.constant 0 : index
    %c0_10 = arith.constant 0 : index
    %11 = vector.load %arg5[%c0_9, %c0_10] : memref<1x128xf32, #tpu.memory_space<vmem>>, vector<1x128xf32>
    %12 = vector.broadcast %11 : vector<1x128xf32> to vector<16x128xf32>
    %13 = arith.addf %10, %12 : vector<16x128xf32>
    %14 = arith.truncf %13 : vector<16x128xf32> to vector<16x128xbf16>
    %c0_11 = arith.constant 0 : index
    %c0_12 = arith.constant 0 : index
    %15 = vector.load %arg6[%c0_11, %c0_12] : memref<16x128xbf16, #tpu.memory_space<vmem>>, vector<16x128xbf16>
    tpu.vector_store %arg6[%c0_11, %c0_12], %14 {strides = array<i32>} : memref<16x128xbf16, #tpu.memory_space<vmem>>, vector<16x128xbf16>,
    return
  }
  func.func @transform_0(%arg0: i32) -> (i32, i32) {
    %c0_i32 = arith.constant 0 : i32
    %c0_i32_0 = arith.constant 0 : i32
    return %arg0, %c0_i32 : i32, i32
  }
  func.func @transform_1(%arg0: i32) -> (i32, i32) {
    %c0_i32 = arith.constant 0 : i32
    %c0_i32_0 = arith.constant 0 : i32
    %c0_i32_1 = arith.constant 0 : i32
    return %c0_i32, %c0_i32_0 : i32, i32
  }
  func.func @transform_2(%arg0: i32) -> (i32, i32) {
    %c0_i32 = arith.constant 0 : i32
    %c0_i32_0 = arith.constant 0 : i32
    %c0_i32_1 = arith.constant 0 : i32
    return %c0_i32, %c0_i32_0 : i32, i32
  }
  func.func @transform_3(%arg0: i32) -> (i32, i32) {
    %c0_i32 = arith.constant 0 : i32
    %c0_i32_0 = arith.constant 0 : i32
    %c0_i32_1 = arith.constant 0 : i32
    return %c0_i32, %c0_i32_0 : i32, i32
  }
  func.func @transform_4(%arg0: i32) -> (i32, i32) {
    %c0_i32 = arith.constant 0 : i32
    %c0_i32_0 = arith.constant 0 : i32
    %c0_i32_1 = arith.constant 0 : i32
    return %c0_i32, %c0_i32_0 : i32, i32
  }
  func.func @transform_5(%arg0: i32) -> (i32, i32) {
    %c0_i32 = arith.constant 0 : i32
    %c0_i32_0 = arith.constant 0 : i32
    return %arg0, %c0_i32 : i32, i32
  }
}

</mosaic_0001>

<llo_original>
// kernel: tpu_custom_call.1
$region0: #{tpu_custom_call.1}
  #allocation0 [shape = 'u32[]', space=smem, size = 0x4, offset = 0x4, fixed_abs, tag = 'smem constant byte address 0x4 - core index']
  #allocation1 [shape = 'u32[144,128]{1,0:T(1,128)}', space=vmem, size = 0x12000, scoped, tag = 'internal scratch']
  %s0 = inlined_call_operand.hbm [shape: bf16[16,128], index: 0, kind: input, shape index: {}]
  %s1 = inlined_call_operand.hbm [shape: bf16[128,128], index: 1, kind: input, shape index: {}]
  %s2 = inlined_call_operand.vmem [shape: f32[1,128], index: 2, kind: input, shape index: {}]
  %s3 = inlined_call_operand.hbm [shape: bf16[128,128], index: 3, kind: input, shape index: {}]
  %s4 = inlined_call_operand.vmem [shape: f32[1,128], index: 4, kind: input, shape index: {}]
  %s5 = inlined_call_operand.hbm [shape: bf16[16,128], index: 5, kind: output, shape index: {}]
  %s6 = sld [smem:[#allocation0]]
  $region42: #{tpu_custom_call.1} parent=0
    _
  %s8 = ssub.s32 1, %s6
  %s9 = scalar_select 0, %s8, %s6
  $region1: #{tpu_custom_call.1} parent=0
    #allocation2 [shape = 'u8[4096]{0}', space=vmem, size = 0x1000, scoped, tag = 'input window, operand 0, single buffered']
    #allocation3 [shape = 's32[1]{0}', space=sflag, size = 0x4, scoped, tag = 'scoped memory for tpu_custom_call.1']
    #allocation4 [shape = 's32[1]{0}', space=sflag, size = 0x4, scoped, tag = 'scoped memory for tpu_custom_call.1']
    #allocation5 [shape = 'u8[32768]{0}', space=vmem, size = 0x8000, scoped, tag = 'input window, operand 1, single buffered']
    #allocation6 [shape = 's32[1]{0}', space=sflag, size = 0x4, scoped, tag = 'scoped memory for tpu_custom_call.1']
    #allocation7 [shape = 'u8[32768]{0}', space=vmem, size = 0x8000, scoped, tag = 'input window, operand 3, single buffered']
    #allocation8 [shape = 'u8[4096]{0}', space=vmem, size = 0x1000, scoped, tag = 'output window, operand 0, single buffered']
    %10 = vsyncpa [#allocation3], 0
    %11 = vsyncpa [#allocation6], 0
    %12 = vsyncpa [#allocation4], 0
    // Predicated region
    $region2: #{tpu_custom_call.1} parent=1 // pred_check
      _
    $region3: #{tpu_custom_call.1} parent=1 // pred_check_branch
      %14 = sbr.rel (0) target = $region5
    $region4: #{tpu_custom_call.1} parent=1 // pred_region
      %s16 = ssub.s32 128, 128
      %17 = vsyncadd [#allocation3], %s16
      %s18 = sshll.u32 [#allocation2], 4
      %s19 = int_to_ptr.vmem [resolvable:$true] %s18
      %24 = dma.hbm_to_vmem [thread:$0]  %s0, 128, %s19, [#allocation3], 64, 64, 4
    $region5: #{tpu_custom_call.1} parent=1 // pred_fallthru
      _
    // Predicated region
    $region6: #{tpu_custom_call.1} parent=1 // pred_check
      _
    $region7: #{tpu_custom_call.1} parent=1 // pred_check_branch
      %26 = sbr.rel (0) target = $region9
    $region8: #{tpu_custom_call.1} parent=1 // pred_region
      %s28 = ssub.s32 1024, 1024
      %29 = vsyncadd [#allocation6], %s28
      %s30 = sshll.u32 [#allocation5], 4
      %s31 = int_to_ptr.vmem [resolvable:$true] %s30
      %36 = dma.hbm_to_vmem [thread:$0]  %s1, 1024, %s31, [#allocation6], 64, 64, 4
    $region9: #{tpu_custom_call.1} parent=1 // pred_fallthru
      _
    // Predicated region
    $region10: #{tpu_custom_call.1} parent=1 // pred_check
      _
    $region11: #{tpu_custom_call.1} parent=1 // pred_check_branch
      %38 = sbr.rel (0) target = $region13
    $region12: #{tpu_custom_call.1} parent=1 // pred_region
      _
    $region13: #{tpu_custom_call.1} parent=1 // pred_fallthru
      _
    // Predicated region
    $region14: #{tpu_custom_call.1} parent=1 // pred_check
      _
    $region15: #{tpu_custom_call.1} parent=1 // pred_check_branch
      %40 = sbr.rel (0) target = $region17
    $region16: #{tpu_custom_call.1} parent=1 // pred_region
      %s42 = ssub.s32 1024, 1024
      %43 = vsyncadd [#allocation6], %s42
      %s44 = sshll.u32 [#allocation7], 4
      %s45 = int_to_ptr.vmem [resolvable:$true] %s44
      %50 = dma.hbm_to_vmem [thread:$0]  %s3, 1024, %s45, [#allocation6], 64, 64, 4
    $region17: #{tpu_custom_call.1} parent=1 // pred_fallthru
      _
    // Predicated region
    $region18: #{tpu_custom_call.1} parent=1 // pred_check
      _
    $region19: #{tpu_custom_call.1} parent=1 // pred_check_branch
      %52 = sbr.rel (0) target = $region21
    $region20: #{tpu_custom_call.1} parent=1 // pred_region
      _
    $region21: #{tpu_custom_call.1} parent=1 // pred_fallthru
      _
    // Predicated region
    $region22: #{tpu_custom_call.1} parent=1 // pred_check
      _
    $region23: #{tpu_custom_call.1} parent=1 // pred_check_branch
      %54 = sbr.rel (0) target = $region25
    $region24: #{tpu_custom_call.1} parent=1 // pred_region
      %55 = dma.done [#allocation3], 128
    $region25: #{tpu_custom_call.1} parent=1 // pred_fallthru
      _
    // Predicated region
    $region26: #{tpu_custom_call.1} parent=1 // pred_check
      _
    $region27: #{tpu_custom_call.1} parent=1 // pred_check_branch
      %57 = sbr.rel (0) target = $region29
    $region28: #{tpu_custom_call.1} parent=1 // pred_region
      %58 = dma.done [#allocation6], 1024
    $region29: #{tpu_custom_call.1} parent=1 // pred_fallthru
      _
    // Predicated region
    $region30: #{tpu_custom_call.1} parent=1 // pred_check
      _
    $region31: #{tpu_custom_call.1} parent=1 // pred_check_branch
      %60 = sbr.rel (0) target = $region33
    $region32: #{tpu_custom_call.1} parent=1 // pred_region
      %61 = dma.done [#allocation6], 1024
    $region33: #{tpu_custom_call.1} parent=1 // pred_fallthru
      _
    %v63 = vld [vmem:[#allocation2] sm:$0xf]
    %v64 = vld [vmem:[#allocation2 + $0x4] sm:$0xf]
    %v65 = vld [vmem:[#allocation5] sm:$0xf]
    %v66 = vld [vmem:[#allocation5 + $0x4] sm:$0xf]
    %v67 = vld [vmem:[#allocation5 + $0x8] sm:$0xf]
    %v68 = vld [vmem:[#allocation5 + $0xc] sm:$0xf]
    %v69 = vld [vmem:[#allocation5 + $0x10] sm:$0xf]
    %v70 = vld [vmem:[#allocation5 + $0x14] sm:$0xf]
    %v71 = vld [vmem:[#allocation5 + $0x18] sm:$0xf]
    %v72 = vld [vmem:[#allocation5 + $0x1c] sm:$0xf]
    %v73 = vld [vmem:[#allocation5 + $0x20] sm:$0xf]
    %v74 = vld [vmem:[#allocation5 + $0x24] sm:$0xf]
    %v75 = vld [vmem:[#allocation5 + $0x28] sm:$0xf]
    %v76 = vld [vmem:[#allocation5 + $0x2c] sm:$0xf]
    %v77 = vld [vmem:[#allocation5 + $0x30] sm:$0xf]
    %v78 = vld [vmem:[#allocation5 + $0x34] sm:$0xf]
    %v79 = vld [vmem:[#allocation5 + $0x38] sm:$0xf]
    %v80 = vld [vmem:[#allocation5 + $0x3c] sm:$0xf]
    %v81 = vld [vmem:[%s2] sm:$0x1]
    %v83 = vlaneseq
    %v84 = vshrl.u32 %v83, 7
    %v85 = vsub.s32 0, %v84
    %v86 = vrot.slane %v81, %v85
    %v90 = vunpack.c.l.b16 %v63
    %v91 = vunpack.c.l.b16 %v64
    %v92 = vpack.c.b16 %v91, %v90
    %v110 = vunpack.c.l.b16 %v65
    %v111 = vunpack.c.l.b16 %v66
    %v112 = vunpack.c.l.b16 %v67
    %v113 = vunpack.c.l.b16 %v68
    %v114 = vunpack.c.l.b16 %v69
    %v115 = vunpack.c.l.b16 %v70
    %v116 = vunpack.c.l.b16 %v71
    %v117 = vunpack.c.l.b16 %v72
    %v118 = vunpack.c.l.b16 %v73
    %v119 = vunpack.c.l.b16 %v74
    %v120 = vunpack.c.l.b16 %v75
    %v121 = vunpack.c.l.b16 %v76
    %v122 = vunpack.c.l.b16 %v77
    %v123 = vunpack.c.l.b16 %v78
    %v124 = vunpack.c.l.b16 %v79
    %v125 = vunpack.c.l.b16 %v80
    %v126 = vpack.c.b16 %v111, %v110
    %v127 = vpack.c.b16 %v113, %v112
    %v128 = vpack.c.b16 %v115, %v114
    %v129 = vpack.c.b16 %v117, %v116
    %v130 = vpack.c.b16 %v119, %v118
    %v131 = vpack.c.b16 %v121, %v120
    %v132 = vpack.c.b16 %v123, %v122
    %v133 = vpack.c.b16 %v125, %v124
    %142 = vmatprep.subr.bf16.mxu0 0
    %143 = vmatpush1.bf16.msra.mxu0 %v126
    %144 = vmatprep.subr.bf16.mxu0 0
    %145 = vmatpush1.bf16.msra.mxu0 %v127
    %146 = vmatprep.subr.bf16.mxu0 0
    %147 = vmatpush1.bf16.msra.mxu0 %v128
    %148 = vmatprep.subr.bf16.mxu0 0
    %149 = vmatpush1.bf16.msra.mxu0 %v129
    %150 = vmatprep.subr.bf16.mxu0 0
    %151 = vmatpush1.bf16.msra.mxu0 %v130
    %152 = vmatprep.subr.bf16.mxu0 0
    %153 = vmatpush1.bf16.msra.mxu0 %v131
    %154 = vmatprep.subr.bf16.mxu0 0
    %155 = vmatpush1.bf16.msra.mxu0 %v132
    %156 = vmatprep.subr.bf16.mxu0 0
    %157 = vmatpush1.bf16.msra.mxu0 %v133
    %158 = vmatprep.subr.bf16.mxu0 0
    %159 = vmatpush1.bf16.msra.mxu0 0
    %160 = vmatprep.subr.bf16.mxu0 0
    %161 = vmatpush1.bf16.msra.mxu0 0
    %162 = vmatprep.subr.bf16.mxu0 0
    %163 = vmatpush1.bf16.msra.mxu0 0
    %164 = vmatprep.subr.bf16.mxu0 0
    %165 = vmatpush1.bf16.msra.mxu0 0
    %166 = vmatprep.subr.bf16.mxu0 0
    %167 = vmatpush1.bf16.msra.mxu0 0
    %168 = vmatprep.subr.bf16.mxu0 0
    %169 = vmatpush1.bf16.msra.mxu0 0
    %170 = vmatprep.subr.bf16.mxu0 0
    %171 = vmatpush1.bf16.msra.mxu0 0
    %172 = vmatprep.subr.bf16.mxu0 0
    %173 = vmatpush1.bf16.msra.mxu0 0
    %174 = vmatprep.mubr.bf16.mxu0 0
    %175 = vmatmul.mubr.bf16.gmra.mrb[0].mxu0 %v92
    %v176 = vpop.f32.mrb[0].mxu0
    %v177 = vadd.f32 %v86, %v176
    %v178 = vpop.f32.mrb[0].mxu0
    %v179 = vpop.f32.mrb[0].mxu0
    %v180 = vadd.f32 %v86, %v179
    %v181 = vpop.f32.mrb[0].mxu0
    %182 = vdwg.mxu0
    %v183 = vmax.f32 %v177, 0.0
    %v184 = vmax.f32 %v180, 0.0
    %v185 = vpack.c.bf16 %v184, %v183
    %v186 = vld [vmem:[#allocation7] sm:$0xf]
    %v187 = vld [vmem:[#allocation7 + $0x4] sm:$0xf]
    %v188 = vld [vmem:[#allocation7 + $0x8] sm:$0xf]
    %v189 = vld [vmem:[#allocation7 + $0xc] sm:$0xf]
    %v190 = vld [vmem:[#allocation7 + $0x10] sm:$0xf]
    %v191 = vld [vmem:[#allocation7 + $0x14] sm:$0xf]
    %v192 = vld [vmem:[#allocation7 + $0x18] sm:$0xf]
    %v193 = vld [vmem:[#allocation7 + $0x1c] sm:$0xf]
    %v194 = vld [vmem:[#allocation7 + $0x20] sm:$0xf]
    %v195 = vld [vmem:[#allocation7 + $0x24] sm:$0xf]
    %v196 = vld [vmem:[#allocation7 + $0x28] sm:$0xf]
    %v197 = vld [vmem:[#allocation7 + $0x2c] sm:$0xf]
    %v198 = vld [vmem:[#allocation7 + $0x30] sm:$0xf]
    %v199 = vld [vmem:[#allocation7 + $0x34] sm:$0xf]
    %v200 = vld [vmem:[#allocation7 + $0x38] sm:$0xf]
    %v201 = vld [vmem:[#allocation7 + $0x3c] sm:$0xf]
    %v202 = vld [vmem:[%s4] sm:$0x1]
    %v204 = vlaneseq
    %v205 = vshrl.u32 %v204, 7
    %v206 = vsub.s32 0, %v205
    %v207 = vrot.slane %v202, %v206
    %v225 = vunpack.c.l.b16 %v186
    %v226 = vunpack.c.l.b16 %v187
    %v227 = vunpack.c.l.b16 %v188
    %v228 = vunpack.c.l.b16 %v189
    %v229 = vunpack.c.l.b16 %v190
    %v230 = vunpack.c.l.b16 %v191
    %v231 = vunpack.c.l.b16 %v192
    %v232 = vunpack.c.l.b16 %v193
    %v233 = vunpack.c.l.b16 %v194
    %v234 = vunpack.c.l.b16 %v195
    %v235 = vunpack.c.l.b16 %v196
    %v236 = vunpack.c.l.b16 %v197
    %v237 = vunpack.c.l.b16 %v198
    %v238 = vunpack.c.l.b16 %v199
    %v239 = vunpack.c.l.b16 %v200
    %v240 = vunpack.c.l.b16 %v201
    %v241 = vpack.c.b16 %v226, %v225
    %v242 = vpack.c.b16 %v228, %v227
    %v243 = vpack.c.b16 %v230, %v229
    %v244 = vpack.c.b16 %v232, %v231
    %v245 = vpack.c.b16 %v234, %v233
    %v246 = vpack.c.b16 %v236, %v235
    %v247 = vpack.c.b16 %v238, %v237
    %v248 = vpack.c.b16 %v240, %v239
    %257 = vmatprep.subr.bf16.mxu0 0
    %258 = vmatpush1.bf16.msra.mxu0 %v241
    %259 = vmatprep.subr.bf16.mxu0 0
    %260 = vmatpush1.bf16.msra.mxu0 %v242
    %261 = vmatprep.subr.bf16.mxu0 0
    %262 = vmatpush1.bf16.msra.mxu0 %v243
    %263 = vmatprep.subr.bf16.mxu0 0
    %264 = vmatpush1.bf16.msra.mxu0 %v244
    %265 = vmatprep.subr.bf16.mxu0 0
    %266 = vmatpush1.bf16.msra.mxu0 %v245
    %267 = vmatprep.subr.bf16.mxu0 0
    %268 = vmatpush1.bf16.msra.mxu0 %v246
    %269 = vmatprep.subr.bf16.mxu0 0
    %270 = vmatpush1.bf16.msra.mxu0 %v247
    %271 = vmatprep.subr.bf16.mxu0 0
    %272 = vmatpush1.bf16.msra.mxu0 %v248
    %273 = vmatprep.subr.bf16.mxu0 0
    %274 = vmatpush1.bf16.msra.mxu0 0
    %275 = vmatprep.subr.bf16.mxu0 0
    %276 = vmatpush1.bf16.msra.mxu0 0
    %277 = vmatprep.subr.bf16.mxu0 0
    %278 = vmatpush1.bf16.msra.mxu0 0
    %279 = vmatprep.subr.bf16.mxu0 0
    %280 = vmatpush1.bf16.msra.mxu0 0
    %281 = vmatprep.subr.bf16.mxu0 0
    %282 = vmatpush1.bf16.msra.mxu0 0
    %283 = vmatprep.subr.bf16.mxu0 0
    %284 = vmatpush1.bf16.msra.mxu0 0
    %285 = vmatprep.subr.bf16.mxu0 0
    %286 = vmatpush1.bf16.msra.mxu0 0
    %287 = vmatprep.subr.bf16.mxu0 0
    %288 = vmatpush1.bf16.msra.mxu0 0
    %289 = vmatprep.mubr.bf16.mxu0 0
    %290 = vmatmul.mubr.bf16.gmra.mrb[0].mxu0 %v185
    %v291 = vpop.f32.mrb[0].mxu0
    %v292 = vadd.f32 %v207, %v291
    %v293 = vpop.f32.mrb[0].mxu0
    %v294 = vpop.f32.mrb[0].mxu0
    %v295 = vadd.f32 %v207, %v294
    %v296 = vpop.f32.mrb[0].mxu0
    %297 = vdwg.mxu0
    %v298 = vpack.c.bf16 %v295, %v292
    %v300 = vunpack.c.l.b16 %v298
    %v301 = vunpack.c.h.b16 %v298
    %v302 = vpack.c.b16 %v300, %v300
    %v303 = vpack.c.b16 %v301, %v301
    %306 = vst [vmem:[#allocation8] sm:$0xf] %v302
    %307 = vst [vmem:[#allocation8 + $0x4] sm:$0xf] %v303
    // Predicated region
    $region34: #{tpu_custom_call.1} parent=1 // pred_check
      _
    $region35: #{tpu_custom_call.1} parent=1 // pred_check_branch
      %309 = sbr.rel (0) target = $region37
    $region36: #{tpu_custom_call.1} parent=1 // pred_region
      %s311 = ssub.s32 128, 128
      %312 = vsyncadd [#allocation4], %s311
      %s313 = sshll.u32 [#allocation8], 4
      %s314 = int_to_ptr.vmem [resolvable:$true] %s313
      %319 = dma.vmem_to_hbm [thread:$0]  %s314, 128, %s5, [#allocation4], 64, 64, 4
    $region37: #{tpu_custom_call.1} parent=1 // pred_fallthru
      _
    // Predicated region
    $region38: #{tpu_custom_call.1} parent=1 // pred_check
      _
    $region39: #{tpu_custom_call.1} parent=1 // pred_check_branch
      %321 = sbr.rel (0) target = $region41
    $region40: #{tpu_custom_call.1} parent=1 // pred_region
      %322 = dma.done [#allocation4], 128
    $region41: #{tpu_custom_call.1} parent=1 // pred_fallthru
      _
    %323 = vsyncpa [#allocation3], 1
    %324 = vsyncpa [#allocation6], 1
    %325 = vsyncpa [#allocation4], 1

</llo_original>
